<compile_context>
chip_gen: v7x
topology: tpu7x:2x2x1
jax: 0.10.0
libtpu: 0.0.40
codegen_flags: <defaults>
</compile_context>

<pallas_src>
import functools
import math

import jax
import jax.numpy as jnp
from jax.experimental import pallas as pl
from jax.experimental.pallas import tpu as pltpu


BN_EPS = 1e-5


# ---------------------------------------------------------------------------
# Pallas kernel (single pass: conv1 -> folded BN -> ReLU -> per-subhead conv2)
# ---------------------------------------------------------------------------

def _make_apply_kernel(n_sub, mid):
    """Builds the fused decoder kernel for a static number of sub-heads.

    Refs (in order):
      x_ref:     (1, C, T)        bf16 channel-major feature tile
      w1t_ref:   (MIDt, C)        bf16 fused conv1 weight, transposed
      scale_ref: (MIDt, 1)        f32  folded BN scale  (gamma * rsqrt(var+eps))
      shift_ref: (MIDt, 1)        f32  folded BN shift  (beta - mean * scale)
      b2_ref:    (COUTt, 1)       f32  fused conv2 bias
      w2t_k:     (cout_k, 2C)     bf16 per-sub-head conv2 weight, transposed
      o_ref:     (1, COUTt, T)    f32  fused output tile (NCHW token-major)
    """

    def kernel(*refs):
        x_ref, w1t_ref, scale_ref, shift_ref, b2_ref = refs[:5]
        w2_refs = refs[5:5 + n_sub]
        o_ref = refs[5 + n_sub]

        x = x_ref[0]                                            # (C, T) bf16
        # conv1 as a channel matmul; accumulate in f32 on the MXU.
        h = jnp.dot(w1t_ref[...], x, preferred_element_type=jnp.float32)
        # Folded training-mode BatchNorm + ReLU (per-row affine, lane bcast).
        h = jnp.maximum(h * scale_ref[...] + shift_ref[...], 0.0)
        hb = h.astype(jnp.bfloat16)

        # Per-sub-head conv2: each head reads only its own 2C hidden rows
        # (no block-diagonal zero-multiplies on the MXU).
        ys = []
        for k in range(n_sub):
            hk = hb[k * mid:(k + 1) * mid, :]
            ys.append(jnp.dot(w2_refs[k][...], hk,
                              preferred_element_type=jnp.float32))
        y = ys[0] if n_sub == 1 else jnp.concatenate(ys, axis=0)
        o_ref[0] = y + b2_ref[...]

    return kernel


# ---------------------------------------------------------------------------
# pallas_call wrapper + tiling heuristics
# ---------------------------------------------------------------------------

def _vmem_config():
    """(tile budget bytes, vmem_limit_bytes) per TPU generation.

    v5e / v6e have 128 MiB physical VMEM -> bigger tiles & limit; v7x has only
    64 MiB (32 MiB scoped default) and unknown chips stay conservative.
    """
    try:
        kind = jax.devices()[0].device_kind.lower()
    except Exception:                                   # pragma: no cover
        kind = ""
    if "v5" in kind or "v6" in kind:
        return 16 << 20, 64 << 20
    return 8 << 20, 32 << 20


def _choose_tile_hw(hw, n_batch, c, midt, coutt, budget, weight_bytes):
    """Largest 128-multiple spatial tile under the VMEM budget, shrunk until
    the (batch, hw-tile) grid has >= ~8 steps (>=4 per core on v7x)."""
    budget = max(budget - 2 * weight_bytes, 2 << 20)     # weights double-buffered
    # Bytes per lane column: double-buffered x (bf16) and out (f32) blocks plus
    # the f32 hidden activation and its bf16 copy.
    per_col = 2 * (2 * c) + 2 * (4 * coutt) + 6 * midt
    tile = (budget // max(per_col, 1)) // 128 * 128
    tile = max(128, min(tile, 1024))
    tile = min(tile, pl.cdiv(hw, 128) * 128)
    while tile > 128 and n_batch * pl.cdiv(hw, tile) < 8:
        tile -= 128
    return tile


def _apply_call(x3, w1t, scale, shift, b2, w2_list, tile, vmem_limit):
    n_batch, c, hw_pad = x3.shape
    midt = w1t.shape[0]
    coutt = b2.shape[0]
    n_sub = len(w2_list)
    mid = midt // n_sub
    num_tiles = hw_pad // tile

    kernel = _make_apply_kernel(n_sub, mid)

    in_specs = [
        pl.BlockSpec((1, c, tile), lambda b, t: (b, 0, t)),
        pl.BlockSpec((midt, c), lambda b, t: (0, 0)),
        pl.BlockSpec((midt, 1), lambda b, t: (0, 0)),
        pl.BlockSpec((midt, 1), lambda b, t: (0, 0)),
        pl.BlockSpec((coutt, 1), lambda b, t: (0, 0)),
    ] + [pl.BlockSpec(w2.shape, lambda b, t: (0, 0)) for w2 in w2_list]

    return pl.pallas_call(
        kernel,
        out_shape=jax.ShapeDtypeStruct((n_batch, coutt, hw_pad), jnp.float32),
        grid=(n_batch, num_tiles),
        in_specs=in_specs,
        out_specs=pl.BlockSpec((1, coutt, tile), lambda b, t: (b, 0, t)),
        compiler_params=pltpu.CompilerParams(
            # Both axes are independent -> shards across v7x's 2 TensorCores.
            dimension_semantics=("parallel", "parallel"),
            vmem_limit_bytes=vmem_limit,
        ),
    )(x3, w1t, scale, shift, b2, *w2_list)


# ---------------------------------------------------------------------------
# Fused decoder forward
# ---------------------------------------------------------------------------

def _fused_heads_apply(features_nchw, fused):
    """Run ALL fused heads on the shared features. Returns (N, COUTt, H, W) f32."""
    n, c, h, w = features_nchw.shape
    hw = h * w
    m = n * hw
    midt = fused["w1t"].shape[0]
    coutt = fused["b2"].shape[0]

    # NCHW is already channel-major: (N, C, H*W) needs NO relayout.
    x3 = features_nchw.reshape(n, c, hw).astype(jnp.bfloat16)

    # --- BatchNorm batch statistics via the Gram trick (no extra Pallas pass).
    # h = W1^T x, so mean_h = (mean_x @ W1) and var_h = w1^T Cov(x) w1; the
    # CxC Gram/covariance is tiny and computed in one small XLA reduction.
    w1q = fused["w1t"].astype(jnp.float32).T                      # (C, MIDt)
    s = jnp.sum(x3, axis=(0, 2), dtype=jnp.float32)               # (C,)
    g = jax.lax.dot_general(x3, x3, (((2,), (2,)), ((0,), (0,))),
                            preferred_element_type=jnp.float32)   # (N, C, C)
    g = jnp.sum(g, axis=0)                                        # (C, C)
    mu_x = s / float(m)
    cov = g / float(m) - jnp.outer(mu_x, mu_x)                    # centered
    mean_h = mu_x @ w1q                                           # (MIDt,)
    var_h = jnp.maximum(jnp.sum(w1q * (cov @ w1q), axis=0), 0.0)
    inv_std = jax.lax.rsqrt(var_h + BN_EPS)
    scale = (fused["gamma"] * inv_std)[:, None]                   # (MIDt, 1)
    shift = (fused["beta"] - mean_h * fused["gamma"] * inv_std)[:, None]

    # --- Single fused Pallas pass over token tiles.
    tile_budget, vmem_limit = _vmem_config()
    weight_bytes = (fused["w1t"].size * 2
                    + sum(w2.size for w2 in fused["w2"]) * 2
                    + (2 * midt + coutt) * 4)
    tile = _choose_tile_hw(hw, n, c, midt, coutt, tile_budget, weight_bytes)
    num_tiles = pl.cdiv(hw, tile)
    hw_pad = num_tiles * tile
    if hw_pad != hw:
        # Padded columns produce garbage that is sliced off below; statistics
        # above were computed from the unpadded tensor, so they are exact.
        x3 = jnp.pad(x3, ((0, 0), (0, 0), (0, hw_pad - hw)))

    y = _apply_call(x3, fused["w1t"], scale, shift, fused["b2"], fused["w2"],
                    tile, vmem_limit)
    return y[:, :, :hw].reshape(n, coutt, h, w)


def _pixel_shuffle_nchw(x, out_channels, r):
    """PixelShuffle(r) on an NCHW tensor (matches torch.nn.PixelShuffle)."""
    if r == 1:
        return x
    n, _, h, w = x.shape
    x = x.reshape(n, out_channels, r, r, h, w)
    x = jnp.transpose(x, (0, 1, 4, 2, 5, 3))
    return x.reshape(n, out_channels, h * r, w * r)


@functools.partial(jax.jit, static_argnames=("plan",))
def decoder_forward(features_nchw, fused, lw, plan):
    """MultiTaskNet.forward: {task: (tensor, ln_var)}.

    `plan` is a static (hashable) description of the fused channel layout and
    per-task weighting modes; `fused` / `lw` contain only arrays.
    """
    upsampling, tasks = plan
    y = _fused_heads_apply(features_nchw, fused)          # (N, COUTt, H, W)
    out = {}
    for (name, n_layers, mode, main_off, wgt_off) in tasks:
        cw = n_layers * upsampling * upsampling
        tensor = _pixel_shuffle_nchw(y[:, main_off:main_off + cw],
                                     n_layers, upsampling)
        if mode == "zero":
            ln_var = jnp.zeros((1,), jnp.float32)                  # ZeroHead * 0.1
        elif mode == "layer_wise":
            ln_var = (400.0 * lw[name]) * 0.1                      # LayerWeights
        else:  # sample_wise: a second MultiTaskHead fused into the same kernel
            ln_var = _pixel_shuffle_nchw(y[:, wgt_off:wgt_off + cw],
                                         n_layers, upsampling) * 0.1
        out[name] = (tensor, ln_var)
    return out


# ---------------------------------------------------------------------------
# Parameter construction (fusion of all sub-heads sharing the same input)
# ---------------------------------------------------------------------------

def _init_subhead(key, in_channels, out_channels, upsampling):
    """One MultiTaskHead's params (Conv1x1 -> BN -> ReLU -> Conv1x1)."""
    mid = 2 * in_channels
    cout = out_channels * upsampling ** 2
    k1, k2, k3 = jax.random.split(key, 3)
    bound1 = 1.0 / math.sqrt(in_channels)
    bound2 = 1.0 / math.sqrt(mid)
    return {
        # conv weights stored (Cin, Cout) for the channel matmul.
        "w1": jax.random.uniform(k1, (in_channels, mid), jnp.float32,
                                 -bound1, bound1),
        # conv1 bias omitted: cancels exactly under training-mode BatchNorm.
        "gamma": jnp.ones((mid,), jnp.float32),     # BatchNorm2d defaults
        "beta": jnp.zeros((mid,), jnp.float32),
        "w2": jax.random.uniform(k2, (mid, cout), jnp.float32, -bound2, bound2),
        "b2": jax.random.uniform(k3, (cout,), jnp.float32, -bound2, bound2),
    }


def _fuse_subheads(subheads):
    """Concat conv1/BN along channels; keep per-sub-head conv2 weights."""
    w1 = jnp.concatenate([s["w1"] for s in subheads], axis=1)       # (C, MIDt)
    gamma = jnp.concatenate([s["gamma"] for s in subheads])
    beta = jnp.concatenate([s["beta"] for s in subheads])
    w2 = tuple(s["w2"].T.astype(jnp.bfloat16) for s in subheads)    # (cout_k, 2C)
    b2 = jnp.concatenate([s["b2"] for s in subheads])[:, None]      # (COUTt, 1)
    return {"w1t": w1.T.astype(jnp.bfloat16),                       # (MIDt, C)
            "gamma": gamma, "beta": beta, "w2": w2, "b2": b2}


def build_decoder(key, layers, in_channels, upsampling, weighting_mode):
    """Builds fused params, layer-wise weights, and a static execution plan."""
    subheads = []          # order defines the fused channel layout
    tasks = []
    lw = {}
    raw = {}               # unfused per-task params (used by the demo reference)
    cout_off = 0
    for name in sorted(layers):
        settings = layers[name]
        key, k_main, k_wgt = jax.random.split(key, 3)
        n = settings["n_layers"]
        cout = n * upsampling ** 2

        head_p = _init_subhead(k_main, in_channels, n, upsampling)
        subheads.append(head_p)
        main_off = cout_off
        cout_off += cout

        wgt_p = None
        if settings["loss"] == "CE" or weighting_mode == "uniform":
            mode, wgt_off = "zero", -1
        elif weighting_mode == "layer_wise":
            mode, wgt_off = "layer_wise", -1
            lw[name] = jnp.zeros((n,), jnp.float32)
        elif weighting_mode == "sample_wise":
            mode = "sample_wise"
            wgt_p = _init_subhead(k_wgt, in_channels, n, upsampling)
            subheads.append(wgt_p)
            wgt_off = cout_off
            cout_off += cout
        else:
            raise NotImplementedError(weighting_mode)

        tasks.append((name, n, mode, main_off, wgt_off))
        raw[name] = {"head": head_p, "weight": wgt_p}

    fused = _fuse_subheads(subheads)
    plan = (upsampling, tuple(tasks))      # static / hashable
    return {"fused": fused, "lw": lw, "plan": plan, "raw": raw}


# ---------------------------------------------------------------------------
# Pure-JAX per-head reference (validates fusion, Gram-trick BN, channel layout)
# ---------------------------------------------------------------------------

def _ref_head_nchw(features_nchw, p, upsampling):
    n, c, h, w = features_nchw.shape
    x = jnp.transpose(features_nchw, (0, 2, 3, 1)).reshape(n * h * w, c)
    xb = x.astype(jnp.bfloat16)
    hid = jnp.dot(xb, p["w1"].astype(jnp.bfloat16),
                  preferred_element_type=jnp.float32)
    mean = jnp.mean(hid, axis=0, keepdims=True)
    var = jnp.maximum(jnp.mean(hid * hid, axis=0, keepdims=True) - mean ** 2, 0.0)
    hid = (hid - mean) * jax.lax.rsqrt(var + BN_EPS)
    hid = jnp.maximum(hid * p["gamma"][None, :] + p["beta"][None, :], 0.0)
    y = jnp.dot(hid.astype(jnp.bfloat16), p["w2"].astype(jnp.bfloat16),
                preferred_element_type=jnp.float32) + p["b2"][None, :]
    y = y.reshape(n, h, w, -1)
    r = upsampling
    cout = y.shape[-1] // (r * r)
    if r == 1:
        return jnp.transpose(y, (0, 3, 1, 2))
    y = y.reshape(n, h, w, cout, r, r)
    y = jnp.transpose(y, (0, 3, 1, 4, 2, 5))
    return y.reshape(n, cout, h * r, w * r)


def _max_abs_diff(a, b):
    return float(jnp.max(jnp.abs(a - b)))


if __name__ == "__main__":
    key = jax.random.PRNGKey(0)
    k_x, k_params = jax.random.split(key)

    # Bottleneck feature map coming out of the (un-translated) encoder.
    # H*W = 400 is deliberately not a multiple of the 128-lane tile so the
    # spatial-padding path of the kernel wrapper is exercised.
    N, C, H, W = 2, 8, 20, 20
    UPSAMPLING = 2
    features = jax.random.normal(k_x, (N, C, H, W), jnp.float32)

    layers = {
        "segmentation": {"n_layers": 3, "loss": "CE"},   # -> ZeroHead weighting
        "depth":        {"n_layers": 2, "loss": "L1"},   # -> sample_wise head
    }
    dec = build_decoder(k_params, layers, in_channels=C,
                        upsampling=UPSAMPLING, weighting_mode="sample_wise")

    out = decoder_forward(features, dec["fused"], dec["lw"], plan=dec["plan"])
    out = jax.block_until_ready(out)

    # Shape checks implied by the PyTorch module.
    seg_t, seg_lv = out["segmentation"]
    dep_t, dep_lv = out["depth"]
    assert seg_t.shape == (N, 3, H * UPSAMPLING, W * UPSAMPLING), seg_t.shape
    assert seg_lv.shape == (1,)
    assert dep_t.shape == (N, 2, H * UPSAMPLING, W * UPSAMPLING), dep_t.shape
    assert dep_lv.shape == (N, 2, H * UPSAMPLING, W * UPSAMPLING), dep_lv.shape

    # Numerical check against an unfused pure-JAX reference per head.
    TOL = 5e-2
    ref_dep = _ref_head_nchw(features, dec["raw"]["depth"]["head"], UPSAMPLING)
    ref_dep_lv = _ref_head_nchw(features, dec["raw"]["depth"]["weight"],
                                UPSAMPLING) * 0.1
    ref_seg = _ref_head_nchw(features, dec["raw"]["segmentation"]["head"],
                             UPSAMPLING)
    assert _max_abs_diff(dep_t, ref_dep) < TOL
    assert _max_abs_diff(dep_lv, ref_dep_lv) < TOL
    assert _max_abs_diff(seg_t, ref_seg) < TOL
    assert float(jnp.max(jnp.abs(seg_lv))) == 0.0

    print("KERNEL_OK")
</pallas_src>

<mosaic_0001>
module attributes {stable_mosaic.version = 11 : i64} {
  func.func @kernel(%arg0: i32, %arg1: i32, %arg2: memref<1x8x128xbf16, #tpu.memory_space<vmem>>, %arg3: memref<48x8xbf16, #tpu.memory_space<vmem>>, %arg4: memref<48x1xf32, #tpu.memory_space<vmem>>, %arg5: memref<48x1xf32, #tpu.memory_space<vmem>>, %arg6: memref<28x1xf32, #tpu.memory_space<vmem>>, %arg7: memref<8x16xbf16, #tpu.memory_space<vmem>>, %arg8: memref<8x16xbf16, #tpu.memory_space<vmem>>, %arg9: memref<12x16xbf16, #tpu.memory_space<vmem>>, %arg10: memref<1x28x128xf32, #tpu.memory_space<vmem>>) attributes {dimension_semantics = [#tpu.dimension_semantics<parallel>, #tpu.dimension_semantics<parallel>], iteration_bounds = array<i64: 2, 4>, scalar_prefetch = 0 : i64, scratch_operands = 0 : i64, tpu.core_type = #tpu.core_type<tc>, window_params = [{transform_indices = @transform_0, window_bounds = array<i64: 1, 8, 128>}, {pipeline_mode = #tpu.pipeline_mode<synchronous>, transform_indices = @transform_1, window_bounds = array<i64: 48, 8>}, {pipeline_mode = #tpu.pipeline_mode<synchronous>, transform_indices = @transform_2, window_bounds = array<i64: 48, 1>}, {pipeline_mode = #tpu.pipeline_mode<synchronous>, transform_indices = @transform_3, window_bounds = array<i64: 48, 1>}, {pipeline_mode = #tpu.pipeline_mode<synchronous>, transform_indices = @transform_4, window_bounds = array<i64: 28, 1>}, {pipeline_mode = #tpu.pipeline_mode<synchronous>, transform_indices = @transform_5, window_bounds = array<i64: 8, 16>}, {pipeline_mode = #tpu.pipeline_mode<synchronous>, transform_indices = @transform_6, window_bounds = array<i64: 8, 16>}, {pipeline_mode = #tpu.pipeline_mode<synchronous>, transform_indices = @transform_7, window_bounds = array<i64: 12, 16>}, {transform_indices = @transform_8, window_bounds = array<i64: 1, 28, 128>}]} {
    %c0 = arith.constant 0 : index
    %c0_0 = arith.constant 0 : index
    %c0_1 = arith.constant 0 : index
    %0 = vector.load %arg2[%c0, %c0_0, %c0_1] : memref<1x8x128xbf16, #tpu.memory_space<vmem>>, vector<1x8x128xbf16>
    %1 = vector.shape_cast %0 : vector<1x8x128xbf16> to vector<8x128xbf16>
    %c0_2 = arith.constant 0 : index
    %c0_3 = arith.constant 0 : index
    %2 = vector.load %arg3[%c0_2, %c0_3] : memref<48x8xbf16, #tpu.memory_space<vmem>>, vector<48x8xbf16>
    %cst = arith.constant dense<0.000000e+00> : vector<48x128xf32>
    %3 = tpu.matmul %2, %1, %cst {dimension_numbers = #tpu.dot_dimension_numbers<[1], [0], [0], [1], [0, 0, 1, 1], [], []>} : vector<48x8xbf16>, vector<8x128xbf16>, vector<48x128xf32> -> vector<48x128xf32>
    %c0_4 = arith.constant 0 : index
    %c0_5 = arith.constant 0 : index
    %4 = vector.load %arg4[%c0_4, %c0_5] : memref<48x1xf32, #tpu.memory_space<vmem>>, vector<48x1xf32>
    %5 = vector.broadcast %4 : vector<48x1xf32> to vector<48x128xf32>
    %6 = arith.mulf %3, %5 : vector<48x128xf32>
    %c0_6 = arith.constant 0 : index
    %c0_7 = arith.constant 0 : index
    %7 = vector.load %arg5[%c0_6, %c0_7] : memref<48x1xf32, #tpu.memory_space<vmem>>, vector<48x1xf32>
    %8 = vector.broadcast %7 : vector<48x1xf32> to vector<48x128xf32>
    %9 = arith.addf %6, %8 : vector<48x128xf32>
    %cst_8 = arith.constant 0.000000e+00 : f32
    %10 = vector.broadcast %cst_8 : f32 to vector<48x128xf32>
    %11 = arith.maximumf %9, %10 : vector<48x128xf32>
    %12 = arith.truncf %11 : vector<48x128xf32> to vector<48x128xbf16>
    %13 = vector.extract_strided_slice %12 {offsets = [0, 0], sizes = [16, 128], strides = [1, 1]} : vector<48x128xbf16> to vector<16x128xbf16>
    %c0_9 = arith.constant 0 : index
    %c0_10 = arith.constant 0 : index
    %14 = vector.load %arg7[%c0_9, %c0_10] : memref<8x16xbf16, #tpu.memory_space<vmem>>, vector<8x16xbf16>
    %cst_11 = arith.constant dense<0.000000e+00> : vector<8x128xf32>
    %15 = tpu.matmul %14, %13, %cst_11 {dimension_numbers = #tpu.dot_dimension_numbers<[1], [0], [0], [1], [0, 0, 1, 1], [], []>} : vector<8x16xbf16>, vector<16x128xbf16>, vector<8x128xf32> -> vector<8x128xf32>
    %16 = vector.extract_strided_slice %12 {offsets = [16, 0], sizes = [16, 128], strides = [1, 1]} : vector<48x128xbf16> to vector<16x128xbf16>
    %c0_12 = arith.constant 0 : index
    %c0_13 = arith.constant 0 : index
    %17 = vector.load %arg8[%c0_12, %c0_13] : memref<8x16xbf16, #tpu.memory_space<vmem>>, vector<8x16xbf16>
    %cst_14 = arith.constant dense<0.000000e+00> : vector<8x128xf32>
    %18 = tpu.matmul %17, %16, %cst_14 {dimension_numbers = #tpu.dot_dimension_numbers<[1], [0], [0], [1], [0, 0, 1, 1], [], []>} : vector<8x16xbf16>, vector<16x128xbf16>, vector<8x128xf32> -> vector<8x128xf32>
    %19 = vector.extract_strided_slice %12 {offsets = [32, 0], sizes = [16, 128], strides = [1, 1]} : vector<48x128xbf16> to vector<16x128xbf16>
    %c0_15 = arith.constant 0 : index
    %c0_16 = arith.constant 0 : index
    %20 = vector.load %arg9[%c0_15, %c0_16] : memref<12x16xbf16, #tpu.memory_space<vmem>>, vector<12x16xbf16>
    %cst_17 = arith.constant dense<0.000000e+00> : vector<12x128xf32>
    %21 = tpu.matmul %20, %19, %cst_17 {dimension_numbers = #tpu.dot_dimension_numbers<[1], [0], [0], [1], [0, 0, 1, 1], [], []>} : vector<12x16xbf16>, vector<16x128xbf16>, vector<12x128xf32> -> vector<12x128xf32>
    %22 = tpu.concatenate %15, %18, %21 in 0 : vector<8x128xf32>, vector<8x128xf32>, vector<12x128xf32> -> vector<28x128xf32>
    %c0_18 = arith.constant 0 : index
    %c0_19 = arith.constant 0 : index
    %23 = vector.load %arg6[%c0_18, %c0_19] : memref<28x1xf32, #tpu.memory_space<vmem>>, vector<28x1xf32>
    %24 = vector.broadcast %23 : vector<28x1xf32> to vector<28x128xf32>
    %25 = arith.addf %22, %24 : vector<28x128xf32>
    %c0_20 = arith.constant 0 : index
    %c0_21 = arith.constant 0 : index
    %c0_22 = arith.constant 0 : index
    %26 = vector.load %arg10[%c0_20, %c0_21, %c0_22] : memref<1x28x128xf32, #tpu.memory_space<vmem>>, vector<1x28x128xf32>
    %27 = vector.shape_cast %26 : vector<1x28x128xf32> to vector<28x128xf32>
    %28 = vector.shape_cast %25 : vector<28x128xf32> to vector<1x28x128xf32>
    tpu.vector_store %arg10[%c0_20, %c0_21, %c0_22], %28 {strides = array<i32>} : memref<1x28x128xf32, #tpu.memory_space<vmem>>, vector<1x28x128xf32>,
    return
  }
  func.func @transform_0(%arg0: i32, %arg1: i32) -> (i32, i32, i32) {
    %c0_i32 = arith.constant 0 : i32
    %c0_i32_0 = arith.constant 0 : i32
    return %arg0, %c0_i32, %arg1 : i32, i32, i32
  }
  func.func @transform_1(%arg0: i32, %arg1: i32) -> (i32, i32) {
    %c0_i32 = arith.constant 0 : i32
    %c0_i32_0 = arith.constant 0 : i32
    %c0_i32_1 = arith.constant 0 : i32
    return %c0_i32, %c0_i32_0 : i32, i32
  }
  func.func @transform_2(%arg0: i32, %arg1: i32) -> (i32, i32) {
    %c0_i32 = arith.constant 0 : i32
    %c0_i32_0 = arith.constant 0 : i32
    %c0_i32_1 = arith.constant 0 : i32
    return %c0_i32, %c0_i32_0 : i32, i32
  }
  func.func @transform_3(%arg0: i32, %arg1: i32) -> (i32, i32) {
    %c0_i32 = arith.constant 0 : i32
    %c0_i32_0 = arith.constant 0 : i32
    %c0_i32_1 = arith.constant 0 : i32
    return %c0_i32, %c0_i32_0 : i32, i32
  }
  func.func @transform_4(%arg0: i32, %arg1: i32) -> (i32, i32) {
    %c0_i32 = arith.constant 0 : i32
    %c0_i32_0 = arith.constant 0 : i32
    %c0_i32_1 = arith.constant 0 : i32
    return %c0_i32, %c0_i32_0 : i32, i32
  }
  func.func @transform_5(%arg0: i32, %arg1: i32) -> (i32, i32) {
    %c0_i32 = arith.constant 0 : i32
    %c0_i32_0 = arith.constant 0 : i32
    %c0_i32_1 = arith.constant 0 : i32
    return %c0_i32, %c0_i32_0 : i32, i32
  }
  func.func @transform_6(%arg0: i32, %arg1: i32) -> (i32, i32) {
    %c0_i32 = arith.constant 0 : i32
    %c0_i32_0 = arith.constant 0 : i32
    %c0_i32_1 = arith.constant 0 : i32
    return %c0_i32, %c0_i32_0 : i32, i32
  }
  func.func @transform_7(%arg0: i32, %arg1: i32) -> (i32, i32) {
    %c0_i32 = arith.constant 0 : i32
    %c0_i32_0 = arith.constant 0 : i32
    %c0_i32_1 = arith.constant 0 : i32
    return %c0_i32, %c0_i32_0 : i32, i32
  }
  func.func @transform_8(%arg0: i32, %arg1: i32) -> (i32, i32, i32) {
    %c0_i32 = arith.constant 0 : i32
    %c0_i32_0 = arith.constant 0 : i32
    return %arg0, %c0_i32, %arg1 : i32, i32, i32
  }
}

</mosaic_0001>

<llo_original>
// kernel: decoder_forward.1
$region0: #{decoder_forward.1}
  #allocation0 [shape = 'u32[]', space=smem, size = 0x4, offset = 0x4, fixed_abs, tag = 'smem constant byte address 0x4 - core index']
  #allocation1 [shape = 'u32[144,128]{1,0:T(1,128)}', space=vmem, size = 0x12000, scoped, tag = 'internal scratch']
  %s0 = inlined_call_operand.vmem [shape: bf16[2,8,512], index: 0, kind: input, shape index: {}]
  %s1 = inlined_call_operand.vmem [shape: bf16[48,8], index: 1, kind: input, shape index: {}]
  %s2 = inlined_call_operand.vmem [shape: f32[48,1], index: 2, kind: input, shape index: {}]
  %s3 = inlined_call_operand.vmem [shape: f32[48,1], index: 3, kind: input, shape index: {}]
  %s4 = inlined_call_operand.vmem [shape: f32[28,1], index: 4, kind: input, shape index: {}]
  %s5 = inlined_call_operand.hbm [shape: bf16[8,16], index: 5, kind: input, shape index: {}]
  %s6 = inlined_call_operand.hbm [shape: bf16[8,16], index: 6, kind: input, shape index: {}]
  %s7 = inlined_call_operand.hbm [shape: bf16[12,16], index: 7, kind: input, shape index: {}]
  %s8 = inlined_call_operand.vmem [shape: f32[2,28,512], index: 8, kind: output, shape index: {}]
  %s9 = sld [smem:[#allocation0]]
  $region111: #{decoder_forward.1} parent=0
    _
  %s11 = ssub.s32 1, %s9
  %s12 = scalar_select 0, %s11, %s9
  $region1: #{decoder_forward.1} parent=0
    #allocation2 [shape = 'u8[2048]{0}', space=vmem, size = 0x800, scoped, tag = 'input window, operand 5, single buffered']
    #allocation3 [shape = 's32[2]{0}', space=sflag, size = 0x8, scoped, tag = 'scoped memory for decoder_forward.1']
    #allocation4 [shape = 'u8[2048]{0}', space=vmem, size = 0x800, scoped, tag = 'input window, operand 6, single buffered']
    #allocation5 [shape = 's32[1]{0}', space=sflag, size = 0x4, scoped, tag = 'scoped memory for decoder_forward.1']
    #allocation6 [shape = 'u8[4096]{0}', space=vmem, size = 0x1000, scoped, tag = 'input window, operand 7, single buffered']
    #allocation7 [shape = 'u8[32768]{0}', space=vmem, size = 0x8000, scoped, tag = 'output window, operand 0']
    %13 = vsyncpa [#allocation3], 0
    %14 = vsyncpa [#allocation5], 0
    loop: start=0, step=1, limit=10
    $region2: #{decoder_forward.1} parent=1 // loop_pre_header
      _
    $region3: #{decoder_forward.1} parent=1 // loop_header
      %s16 = sphi 0, %s20
      %p17 = scmp.ge.s32.totalorder %s16, 10
      %s23 = sphi 0, %s35
      %s24 = sphi 0, %s31
      %s25 = sphi 0, %s23
      %s26 = sphi 0, %s24
      %s27 = sphi 0, %s25
      %s28 = sphi 0, %s26
      %s40 = sphi 0, %s42
      %s43 = sphi 0, %s40
      %s44 = sphi 0, %s43
      %s60 = sphi 0, %s44
      %s64 = sphi 0, %s64
      %s66 = sphi 0, %s64
      %s67 = sphi 0, %s66
      %s81 = sphi 0, %s67
      %s85 = sphi 0, %s85
      %s87 = sphi 0, %s85
      %s88 = sphi 0, %s87
      %s102 = sphi 0, %s88
      %s106 = sphi 0, %s106
      %s108 = sphi 0, %s106
      %s109 = sphi 0, %s108
      %s123 = sphi 0, %s109
      %s127 = sphi 0, %s127
      %s129 = sphi 0, %s127
      %s130 = sphi 0, %s129
      %s144 = sphi 0, %s130
      %s148 = sphi 0, %s148
      %s150 = sphi 0, %s148
      %s151 = sphi 0, %s150
      %s165 = sphi 0, %s151
      %s169 = sphi 0, %s169
      %s171 = sphi 0, %s169
      %s172 = sphi 0, %s171
      %s186 = sphi 0, %s172
      %s190 = sphi 0, %s190
      %s192 = sphi 0, %s190
      %s193 = sphi 0, %s192
      %s207 = sphi 0, %s193
      %s215 = sphi 0, %s217
      %s218 = sphi 0, %s215
      %s219 = sphi 0, %s218
      %s235 = sphi 0, %s219
    $region4: #{decoder_forward.1} parent=1 // loop_header_branch
      %19 = sbr.rel (%p17) target = $region8
    $region5: #{decoder_forward.1} parent=1 // loop_body
      %s21 = ssub.s32 %s16, 1
      %s22 = ssub.s32 %s16, 2
      %s29 = sadd.s32 1, %s24
      %p30 = scmp.ge.s32.totalorder %s29, 4
      %s31 = scalar_select %p30, 0, %s29
      %s32 = sadd.s32 1, %s23
      %s33 = scalar_select %p30, %s32, %s23
      %p34 = scmp.ge.s32.totalorder %s33, 2
      %s35 = scalar_select %p34, 0, %s33
      %s36 = ssub.s32 %s23, %s35
      %s37 = ssub.s32 %s24, %s31
      %s38 = sor.u32 %s36, %s37
      %p39 = scmp.eq.s32.totalorder %s38, 0
      %s41 = sadd.s32 %s40, 1
      %s42 = scalar_select %p39, %s40, %s41
      %p45 = pneg %p39
      %p46 = scmp.eq.s32.totalorder %s16, 7
      %p47 = por %p45, %p46
      %p48 = scmp.ne.s32.totalorder %s40, %s43
      %p49 = scmp.eq.s32.totalorder %s16, 0
      %p50 = por %p48, %p49
      %p51 = scmp.ne.s32.totalorder %s40, %s43
      %p52 = scmp.eq.s32.totalorder %s21, 7
      %p53 = por %p51, %p52
      %p54 = scmp.ne.s32.totalorder %s43, %s44
      %p55 = scmp.eq.s32.totalorder %s21, 0
      %p56 = por %p54, %p55
      %p57 = scmp.ne.s32.totalorder %s43, %s44
      %p58 = scmp.eq.s32.totalorder %s22, 7
      %p59 = por %p57, %p58
      %p61 = scmp.ne.s32.totalorder %s44, %s60
      %p62 = scmp.eq.s32.totalorder %s22, 0
      %p63 = por %p61, %p62
      %s65 = sadd.s32 %s64, 1
      %p68 = scmp.eq.s32.totalorder %s16, 7
      %p69 = scmp.ne.s32.totalorder %s64, %s66
      %p70 = scmp.eq.s32.totalorder %s16, 0
      %p71 = por %p69, %p70
      %p72 = scmp.ne.s32.totalorder %s64, %s66
      %p73 = scmp.eq.s32.totalorder %s21, 7
      %p74 = por %p72, %p73
      %p75 = scmp.ne.s32.totalorder %s66, %s67
      %p76 = scmp.eq.s32.totalorder %s21, 0
      %p77 = por %p75, %p76
      %p78 = scmp.ne.s32.totalorder %s66, %s67
      %p79 = scmp.eq.s32.totalorder %s22, 7
      %p80 = por %p78, %p79
      %p82 = scmp.ne.s32.totalorder %s67, %s81
      %p83 = scmp.eq.s32.totalorder %s22, 0
      %p84 = por %p82, %p83
      %s86 = sadd.s32 %s85, 1
      %p89 = scmp.eq.s32.totalorder %s16, 7
      %p90 = scmp.ne.s32.totalorder %s85, %s87
      %p91 = scmp.eq.s32.totalorder %s16, 0
      %p92 = por %p90, %p91
      %p93 = scmp.ne.s32.totalorder %s85, %s87
      %p94 = scmp.eq.s32.totalorder %s21, 7
      %p95 = por %p93, %p94
      %p96 = scmp.ne.s32.totalorder %s87, %s88
      %p97 = scmp.eq.s32.totalorder %s21, 0
      %p98 = por %p96, %p97
      %p99 = scmp.ne.s32.totalorder %s87, %s88
      %p100 = scmp.eq.s32.totalorder %s22, 7
      %p101 = por %p99, %p100
      %p103 = scmp.ne.s32.totalorder %s88, %s102
      %p104 = scmp.eq.s32.totalorder %s22, 0
      %p105 = por %p103, %p104
      %s107 = sadd.s32 %s106, 1
      %p110 = scmp.eq.s32.totalorder %s16, 7
      %p111 = scmp.ne.s32.totalorder %s106, %s108
      %p112 = scmp.eq.s32.totalorder %s16, 0
      %p113 = por %p111, %p112
      %p114 = scmp.ne.s32.totalorder %s106, %s108
      %p115 = scmp.eq.s32.totalorder %s21, 7
      %p116 = por %p114, %p115
      %p117 = scmp.ne.s32.totalorder %s108, %s109
      %p118 = scmp.eq.s32.totalorder %s21, 0
      %p119 = por %p117, %p118
      %p120 = scmp.ne.s32.totalorder %s108, %s109
      %p121 = scmp.eq.s32.totalorder %s22, 7
      %p122 = por %p120, %p121
      %p124 = scmp.ne.s32.totalorder %s109, %s123
      %p125 = scmp.eq.s32.totalorder %s22, 0
      %p126 = por %p124, %p125
      %s128 = sadd.s32 %s127, 1
      %p131 = scmp.eq.s32.totalorder %s16, 7
      %p132 = scmp.ne.s32.totalorder %s127, %s129
      %p133 = scmp.eq.s32.totalorder %s16, 0
      %p134 = por %p132, %p133
      %p135 = scmp.ne.s32.totalorder %s127, %s129
      %p136 = scmp.eq.s32.totalorder %s21, 7
      %p137 = por %p135, %p136
      %p138 = scmp.ne.s32.totalorder %s129, %s130
      %p139 = scmp.eq.s32.totalorder %s21, 0
      %p140 = por %p138, %p139
      %p141 = scmp.ne.s32.totalorder %s129, %s130
      %p142 = scmp.eq.s32.totalorder %s22, 7
      %p143 = por %p141, %p142
      %p145 = scmp.ne.s32.totalorder %s130, %s144
      %p146 = scmp.eq.s32.totalorder %s22, 0
      %p147 = por %p145, %p146
      %s149 = sadd.s32 %s148, 1
      %p152 = scmp.eq.s32.totalorder %s16, 7
      %p153 = scmp.ne.s32.totalorder %s148, %s150
      %p154 = scmp.eq.s32.totalorder %s16, 0
      %p155 = por %p153, %p154
      %p156 = scmp.ne.s32.totalorder %s148, %s150
      %p157 = scmp.eq.s32.totalorder %s21, 7
      %p158 = por %p156, %p157
      %p159 = scmp.ne.s32.totalorder %s150, %s151
      %p160 = scmp.eq.s32.totalorder %s21, 0
      %p161 = por %p159, %p160
      %p162 = scmp.ne.s32.totalorder %s150, %s151
      %p163 = scmp.eq.s32.totalorder %s22, 7
      %p164 = por %p162, %p163
      %p166 = scmp.ne.s32.totalorder %s151, %s165
      %p167 = scmp.eq.s32.totalorder %s22, 0
      %p168 = por %p166, %p167
      %s170 = sadd.s32 %s169, 1
      %p173 = scmp.eq.s32.totalorder %s16, 7
      %p174 = scmp.ne.s32.totalorder %s169, %s171
      %p175 = scmp.eq.s32.totalorder %s16, 0
      %p176 = por %p174, %p175
      %p177 = scmp.ne.s32.totalorder %s169, %s171
      %p178 = scmp.eq.s32.totalorder %s21, 7
      %p179 = por %p177, %p178
      %p180 = scmp.ne.s32.totalorder %s171, %s172
      %p181 = scmp.eq.s32.totalorder %s21, 0
      %p182 = por %p180, %p181
      %p183 = scmp.ne.s32.totalorder %s171, %s172
      %p184 = scmp.eq.s32.totalorder %s22, 7
      %p185 = por %p183, %p184
      %p187 = scmp.ne.s32.totalorder %s172, %s186
      %p188 = scmp.eq.s32.totalorder %s22, 0
      %p189 = por %p187, %p188
      %s191 = sadd.s32 %s190, 1
      %p194 = scmp.eq.s32.totalorder %s16, 7
      %p195 = scmp.ne.s32.totalorder %s190, %s192
      %p196 = scmp.eq.s32.totalorder %s16, 0
      %p197 = por %p195, %p196
      %p198 = scmp.ne.s32.totalorder %s190, %s192
      %p199 = scmp.eq.s32.totalorder %s21, 7
      %p200 = por %p198, %p199
      %p201 = scmp.ne.s32.totalorder %s192, %s193
      %p202 = scmp.eq.s32.totalorder %s21, 0
      %p203 = por %p201, %p202
      %p204 = scmp.ne.s32.totalorder %s192, %s193
      %p205 = scmp.eq.s32.totalorder %s22, 7
      %p206 = por %p204, %p205
      %p208 = scmp.ne.s32.totalorder %s193, %s207
      %p209 = scmp.eq.s32.totalorder %s22, 0
      %p210 = por %p208, %p209
      %s211 = ssub.s32 %s23, %s35
      %s212 = ssub.s32 %s24, %s31
      %s213 = sor.u32 %s211, %s212
      %p214 = scmp.eq.s32.totalorder %s213, 0
      %s216 = sadd.s32 %s215, 1
      %s217 = scalar_select %p214, %s215, %s216
      %p220 = pneg %p214
      %p221 = scmp.eq.s32.totalorder %s16, 7
      %p222 = por %p220, %p221
      %p223 = scmp.ne.s32.totalorder %s215, %s218
      %p224 = scmp.eq.s32.totalorder %s16, 0
      %p225 = por %p223, %p224
      %p226 = scmp.ne.s32.totalorder %s215, %s218
      %p227 = scmp.eq.s32.totalorder %s21, 7
      %p228 = por %p226, %p227
      %p229 = scmp.ne.s32.totalorder %s218, %s219
      %p230 = scmp.eq.s32.totalorder %s21, 0
      %p231 = por %p229, %p230
      %p232 = scmp.ne.s32.totalorder %s218, %s219
      %p233 = scmp.eq.s32.totalorder %s22, 7
      %p234 = por %p232, %p233
      %p236 = scmp.ne.s32.totalorder %s219, %s235
      %p237 = scmp.eq.s32.totalorder %s22, 0
      %p238 = por %p236, %p237
      %p239 = scmp.le.s32.totalorder 1, %s16
      %p240 = scmp.lt.s32.totalorder %s16, 9
      %p241 = pnand %p239, %p240
      %p242 = pneg %p241
      // Predicated region
      $region9: #{decoder_forward.1} parent=5 // pred_check
        _
      $region10: #{decoder_forward.1} parent=5 // pred_check_branch
        %244 = sbr.rel (%p241) target = $region12
      $region11: #{decoder_forward.1} parent=5 // pred_region
        %s245 = ssub.s32 %s16, 1
        // Predicated region
        $region13: #{decoder_forward.1} parent=11 // pred_check
          %p246 = pneg %p77
        $region14: #{decoder_forward.1} parent=11 // pred_check_branch
          %248 = sbr.rel (%p246) target = $region16
        $region15: #{decoder_forward.1} parent=11 // pred_region
          _
        $region16: #{decoder_forward.1} parent=11 // pred_fallthru
          _
        // Predicated region
        $region17: #{decoder_forward.1} parent=11 // pred_check
          %p249 = pneg %p98
        $region18: #{decoder_forward.1} parent=11 // pred_check_branch
          %251 = sbr.rel (%p249) target = $region20
        $region19: #{decoder_forward.1} parent=11 // pred_region
          _
        $region20: #{decoder_forward.1} parent=11 // pred_fallthru
          _
        // Predicated region
        $region21: #{decoder_forward.1} parent=11 // pred_check
          %p252 = pneg %p119
        $region22: #{decoder_forward.1} parent=11 // pred_check_branch
          %254 = sbr.rel (%p252) target = $region24
        $region23: #{decoder_forward.1} parent=11 // pred_region
          _
        $region24: #{decoder_forward.1} parent=11 // pred_fallthru
          _
        // Predicated region
        $region25: #{decoder_forward.1} parent=11 // pred_check
          %p255 = pneg %p140
        $region26: #{decoder_forward.1} parent=11 // pred_check_branch
          %257 = sbr.rel (%p255) target = $region28
        $region27: #{decoder_forward.1} parent=11 // pred_region
          _
        $region28: #{decoder_forward.1} parent=11 // pred_fallthru
          _
        // Predicated region
        $region29: #{decoder_forward.1} parent=11 // pred_check
          %p258 = pneg %p161
        $region30: #{decoder_forward.1} parent=11 // pred_check_branch
          %260 = sbr.rel (%p258) target = $region32
        $region31: #{decoder_forward.1} parent=11 // pred_region
          %s262 = ssub.s32 64, 64
          %263 = vsyncadd [#allocation3], %s262
          %s265 = sshll.u32 [#allocation2], 4
          %s266 = int_to_ptr.vmem [resolvable:$true] %s265
          %268 = dma.hbm_to_vmem [thread:$0]  %s5, 64, %s266, [#allocation3]
        $region32: #{decoder_forward.1} parent=11 // pred_fallthru
          _
        // Predicated region
        $region33: #{decoder_forward.1} parent=11 // pred_check
          %p269 = pneg %p182
        $region34: #{decoder_forward.1} parent=11 // pred_check_branch
          %271 = sbr.rel (%p269) target = $region36
        $region35: #{decoder_forward.1} parent=11 // pred_region
          %s273 = ssub.s32 64, 64
          %274 = vsyncadd [#allocation5], %s273
          %s276 = sshll.u32 [#allocation4], 4
          %s277 = int_to_ptr.vmem [resolvable:$true] %s276
          %279 = dma.hbm_to_vmem [thread:$0]  %s6, 64, %s277, [#allocation5]
        $region36: #{decoder_forward.1} parent=11 // pred_fallthru
          _
        // Predicated region
        $region37: #{decoder_forward.1} parent=11 // pred_check
          %p280 = pneg %p203
        $region38: #{decoder_forward.1} parent=11 // pred_check_branch
          %282 = sbr.rel (%p280) target = $region40
        $region39: #{decoder_forward.1} parent=11 // pred_region
          %s284 = ssub.s32 128, 128
          %285 = vsyncadd [#allocation5], %s284
          %s286 = sshll.u32 [#allocation6], 4
          %s287 = int_to_ptr.vmem [resolvable:$true] %s286
          %292 = dma.hbm_to_vmem [thread:$0]  %s7, 128, %s287, [#allocation5], 64, 64, 4
        $region40: #{decoder_forward.1} parent=11 // pred_fallthru
          _
      $region12: #{decoder_forward.1} parent=5 // pred_fallthru
        _
      %p293 = scmp.lt.s32.totalorder %s16, 8
      // Predicated region
      $region41: #{decoder_forward.1} parent=5 // pred_check
        %p294 = pneg %p293
      $region42: #{decoder_forward.1} parent=5 // pred_check_branch
        %296 = sbr.rel (%p294) target = $region44
      $region43: #{decoder_forward.1} parent=5 // pred_region
        // Predicated region
        $region45: #{decoder_forward.1} parent=43 // pred_check
          %p297 = pneg %p50
        $region46: #{decoder_forward.1} parent=43 // pred_check_branch
          %299 = sbr.rel (%p297) target = $region48
        $region47: #{decoder_forward.1} parent=43 // pred_region
          %p300 = scmp.lt.s32.totalorder %s23, 1
          %s301 = scalar_select %p300, %s23, 1
          %p302 = scmp.lt.s32.totalorder %s24, 3
          %s303 = scalar_select %p302, %s24, 3
          %s304 = smul.addr %s301, 4
          %s305 = sadd.s32 %s303, %s304
          %s306 = smul.addr %s305, 4
          %s307 = scalar_lea.vmem %s0, %s306
        $region48: #{decoder_forward.1} parent=43 // pred_fallthru
          _
      $region44: #{decoder_forward.1} parent=5 // pred_fallthru
        _
      %p308 = scmp.le.s32.totalorder 1, %s16
      %p309 = scmp.lt.s32.totalorder %s16, 9
      %p310 = pnand %p308, %p309
      %p311 = pneg %p310
      // Predicated region
      $region49: #{decoder_forward.1} parent=5 // pred_check
        _
      $region50: #{decoder_forward.1} parent=5 // pred_check_branch
        %313 = sbr.rel (%p310) target = $region52
      $region51: #{decoder_forward.1} parent=5 // pred_region
        %s314 = ssub.s32 %s16, 1
        // Predicated region
        $region53: #{decoder_forward.1} parent=51 // pred_check
          %p315 = pneg %p161
        $region54: #{decoder_forward.1} parent=51 // pred_check_branch
          %317 = sbr.rel (%p315) target = $region56
        $region55: #{decoder_forward.1} parent=51 // pred_region
          %318 = dma.done [#allocation3], 64
        $region56: #{decoder_forward.1} parent=51 // pred_fallthru
          _
        // Predicated region
        $region57: #{decoder_forward.1} parent=51 // pred_check
          %p319 = pneg %p182
        $region58: #{decoder_forward.1} parent=51 // pred_check_branch
          %321 = sbr.rel (%p319) target = $region60
        $region59: #{decoder_forward.1} parent=51 // pred_region
          %322 = dma.done [#allocation5], 64
        $region60: #{decoder_forward.1} parent=51 // pred_fallthru
          _
        // Predicated region
        $region61: #{decoder_forward.1} parent=51 // pred_check
          %p323 = pneg %p203
        $region62: #{decoder_forward.1} parent=51 // pred_check_branch
          %325 = sbr.rel (%p323) target = $region64
        $region63: #{decoder_forward.1} parent=51 // pred_region
          %326 = dma.done [#allocation5], 128
        $region64: #{decoder_forward.1} parent=51 // pred_fallthru
          _
        %p327 = scmp.lt.s32.totalorder %s25, 1
        %s328 = scalar_select %p327, %s25, 1
        %p329 = scmp.lt.s32.totalorder %s26, 3
        %s330 = scalar_select %p329, %s26, 3
        %s331 = smul.addr %s328, 4
        %s332 = sadd.s32 %s330, %s331
        %s333 = smul.addr %s332, 4
        %s334 = scalar_lea.vmem %s0, %s333
        %p335 = pneg %p56
        %p336 = pneg %p53
        %p337 = pneg %p77
        %p338 = pneg %p74
        %p339 = pneg %p98
        %p340 = pneg %p95
        %p341 = pneg %p119
        %p342 = pneg %p116
        %p343 = pneg %p140
        %p344 = pneg %p137
        %p345 = pneg %p161
        %p346 = pneg %p158
        %p347 = pneg %p182
        %p348 = pneg %p179
        %p349 = pneg %p203
        %p350 = pneg %p200
        %p351 = pneg %p231
        %p352 = pneg %p228
        %s353 = sand.u32 %s218, 1
        %s354 = sand.u32 %s218, 1
        %s355 = smul.addr %s354, 32
        %s356 = scalar_lea.vmem [#allocation7], %s355
        %p357 = scmp.lt.s32.totalorder %s25, 1
        %s358 = scalar_select %p357, %s25, 1
        %p359 = scmp.lt.s32.totalorder %s26, 3
        %s360 = scalar_select %p359, %s26, 3
        %s361 = smul.addr %s358, 4
        %s362 = sadd.s32 %s360, %s361
        %s363 = smul.addr %s362, 4
        %s364 = scalar_lea.vmem %s0, %s363
        %v366 = vld [vmem:[%s364] sm:$0xf]
        %v367 = vld [vmem:[%s1] sm:$0xf]
        %v368 = vld [vmem:[%s1 + $0x4] sm:$0xf]
        %v369 = vld [vmem:[%s1 + $0x8] sm:$0xf]
        %v370 = vld [vmem:[%s1 + $0xc] sm:$0xf]
        %v371 = vld [vmem:[%s1 + $0x10] sm:$0xf]
        %v372 = vld [vmem:[%s1 + $0x14] sm:$0xf]
        %v379 = vunpack.c.l.b16 %v367
        %v380 = vunpack.c.l.b16 %v368
        %v381 = vunpack.c.l.b16 %v369
        %v382 = vunpack.c.l.b16 %v370
        %v383 = vunpack.c.l.b16 %v371
        %v384 = vunpack.c.l.b16 %v372
        %v385 = vpack.c.b16 %v380, %v379
        %v386 = vpack.c.b16 %v382, %v381
        %v387 = vpack.c.b16 %v384, %v383
        %vm388 = vcmask 64512
        %v390 = vsel %vm388, %v385, 0
        %v393 = vsel %vm388, %v386, 0
        %v396 = vsel %vm388, %v387, 0
        %vm398 = vcmask 1043456
        %v400 = vsel %vm398, %v366, 0
        %402 = vmatprep.subr.bf16.mxu0 0
        %403 = vmatpush1.bf16.msra.mxu0 %v400
        %404 = vmatprep.subr.bf16.mxu0 0
        %405 = vmatpush1.bf16.msra.mxu0 0
        %406 = vmatprep.subr.bf16.mxu0 0
        %407 = vmatpush1.bf16.msra.mxu0 0
        %408 = vmatprep.subr.bf16.mxu0 0
        %409 = vmatpush1.bf16.msra.mxu0 0
        %410 = vmatprep.subr.bf16.mxu0 0
        %411 = vmatpush1.bf16.msra.mxu0 0
        %412 = vmatprep.subr.bf16.mxu0 0
        %413 = vmatpush1.bf16.msra.mxu0 0
        %414 = vmatprep.subr.bf16.mxu0 0
        %415 = vmatpush1.bf16.msra.mxu0 0
        %416 = vmatprep.subr.bf16.mxu0 0
        %417 = vmatpush1.bf16.msra.mxu0 0
        %418 = vmatprep.subr.bf16.mxu0 0
        %419 = vmatpush1.bf16.msra.mxu0 0
        %420 = vmatprep.subr.bf16.mxu0 0
        %421 = vmatpush1.bf16.msra.mxu0 0
        %422 = vmatprep.subr.bf16.mxu0 0
        %423 = vmatpush1.bf16.msra.mxu0 0
        %424 = vmatprep.subr.bf16.mxu0 0
        %425 = vmatpush1.bf16.msra.mxu0 0
        %426 = vmatprep.subr.bf16.mxu0 0
        %427 = vmatpush1.bf16.msra.mxu0 0
        %428 = vmatprep.subr.bf16.mxu0 0
        %429 = vmatpush1.bf16.msra.mxu0 0
        %430 = vmatprep.subr.bf16.mxu0 0
        %431 = vmatpush1.bf16.msra.mxu0 0
        %432 = vmatprep.subr.bf16.mxu0 0
        %433 = vmatpush1.bf16.msra.mxu0 0
        %434 = vmatprep.mubr.bf16.mxu0 0
        %435 = vmatmul.mubr.bf16.gmra.mrb[0].mxu0 %v390
        %v436 = vpop.f32.mrb[0].mxu0
        %v437 = vadd.f32 0.0, %v436
        %v438 = vpop.f32.mrb[0].mxu0
        %v439 = vpop.f32.mrb[0].mxu0
        %v440 = vadd.f32 0.0, %v439
        %v441 = vpop.f32.mrb[0].mxu0
        %442 = vmatprep.mubr.bf16.mxu0 0
        %443 = vmatmul.mubr.bf16.gmra.mrb[0].mxu0 %v393
        %v444 = vpop.f32.mrb[0].mxu0
        %v445 = vadd.f32 0.0, %v444
        %v446 = vpop.f32.mrb[0].mxu0
        %v447 = vpop.f32.mrb[0].mxu0
        %v448 = vadd.f32 0.0, %v447
        %v449 = vpop.f32.mrb[0].mxu0
        %450 = vmatprep.mubr.bf16.mxu0 0
        %451 = vmatmul.mubr.bf16.gmra.mrb[0].mxu0 %v396
        %v452 = vpop.f32.mrb[0].mxu0
        %v453 = vadd.f32 0.0, %v452
        %v454 = vpop.f32.mrb[0].mxu0
        %v455 = vpop.f32.mrb[0].mxu0
        %v456 = vadd.f32 0.0, %v455
        %v457 = vpop.f32.mrb[0].mxu0
        %458 = vdwg.mxu0
        %v459 = vld [vmem:[%s2] sm:$0xff]
        %v460 = vld [vmem:[%s2 + $0x8] sm:$0xff]
        %v461 = vld [vmem:[%s2 + $0x10] sm:$0xff]
        %v462 = vld [vmem:[%s2 + $0x18] sm:$0xff]
        %v463 = vld [vmem:[%s2 + $0x20] sm:$0xff]
        %v464 = vld [vmem:[%s2 + $0x28] sm:$0xff]
        %466 = vset.pattern.permute.xlu0 0
        %467 = vperm.xlu0 %466, %v459
        %v468 = vpop.permute.xlu0 %467
        %471 = vset.pattern.permute.xlu0 0
        %472 = vperm.xlu0 %471, %v460
        %v473 = vpop.permute.xlu0 %472
        %476 = vset.pattern.permute.xlu0 0
        %477 = vperm.xlu0 %476, %v461
        %v478 = vpop.permute.xlu0 %477
        %481 = vset.pattern.permute.xlu0 0
        %482 = vperm.xlu0 %481, %v462
        %v483 = vpop.permute.xlu0 %482
        %486 = vset.pattern.permute.xlu0 0
        %487 = vperm.xlu0 %486, %v463
        %v488 = vpop.permute.xlu0 %487
        %491 = vset.pattern.permute.xlu0 0
        %492 = vperm.xlu0 %491, %v464
        %v493 = vpop.permute.xlu0 %492
        %v495 = vmul.f32 %v437, %v468
        %v496 = vmul.f32 %v440, %v473
        %v497 = vmul.f32 %v445, %v478
        %v498 = vmul.f32 %v448, %v483
        %v499 = vmul.f32 %v453, %v488
        %v500 = vmul.f32 %v456, %v493
        %v501 = vld [vmem:[%s3] sm:$0xff]
        %v502 = vld [vmem:[%s3 + $0x8] sm:$0xff]
        %v503 = vld [vmem:[%s3 + $0x10] sm:$0xff]
        %v504 = vld [vmem:[%s3 + $0x18] sm:$0xff]
        %v505 = vld [vmem:[%s3 + $0x20] sm:$0xff]
        %v506 = vld [vmem:[%s3 + $0x28] sm:$0xff]
        %508 = vset.pattern.permute.xlu0 0
        %509 = vperm.xlu0 %508, %v501
        %v510 = vpop.permute.xlu0 %509
        %513 = vset.pattern.permute.xlu0 0
        %514 = vperm.xlu0 %513, %v502
        %v515 = vpop.permute.xlu0 %514
        %518 = vset.pattern.permute.xlu0 0
        %519 = vperm.xlu0 %518, %v503
        %v520 = vpop.permute.xlu0 %519
        %523 = vset.pattern.permute.xlu0 0
        %524 = vperm.xlu0 %523, %v504
        %v525 = vpop.permute.xlu0 %524
        %528 = vset.pattern.permute.xlu0 0
        %529 = vperm.xlu0 %528, %v505
        %v530 = vpop.permute.xlu0 %529
        %533 = vset.pattern.permute.xlu0 0
        %534 = vperm.xlu0 %533, %v506
        %v535 = vpop.permute.xlu0 %534
        %v537 = vadd.f32 %v495, %v510
        %v538 = vadd.f32 %v496, %v515
        %v539 = vadd.f32 %v497, %v520
        %v540 = vadd.f32 %v498, %v525
        %v541 = vadd.f32 %v499, %v530
        %v542 = vadd.f32 %v500, %v535
        %v543 = vmax.f32 %v537, 0.0
        %v544 = vmax.f32 %v538, 0.0
        %v545 = vmax.f32 %v539, 0.0
        %v546 = vmax.f32 %v540, 0.0
        %v547 = vmax.f32 %v541, 0.0
        %v548 = vmax.f32 %v542, 0.0
        %v549 = vpack.c.bf16 %v544, %v543
        %v550 = vpack.c.bf16 %v546, %v545
        %v551 = vpack.c.bf16 %v548, %v547
        %v552 = vld [vmem:[#allocation2] sm:$0xf]
        %vm553 = vcmask 130048
        %v555 = vsel %vm553, %v552, 0
        %557 = vmatprep.subr.bf16.mxu0 0
        %558 = vmatpush1.bf16.msra.mxu0 %v549
        %559 = vmatprep.subr.bf16.mxu0 0
        %560 = vmatpush1.bf16.msra.mxu0 0
        %561 = vmatprep.subr.bf16.mxu0 0
        %562 = vmatpush1.bf16.msra.mxu0 0
        %563 = vmatprep.subr.bf16.mxu0 0
        %564 = vmatpush1.bf16.msra.mxu0 0
        %565 = vmatprep.subr.bf16.mxu0 0
        %566 = vmatpush1.bf16.msra.mxu0 0
        %567 = vmatprep.subr.bf16.mxu0 0
        %568 = vmatpush1.bf16.msra.mxu0 0
        %569 = vmatprep.subr.bf16.mxu0 0
        %570 = vmatpush1.bf16.msra.mxu0 0
        %571 = vmatprep.subr.bf16.mxu0 0
        %572 = vmatpush1.bf16.msra.mxu0 0
        %573 = vmatprep.subr.bf16.mxu0 0
        %574 = vmatpush1.bf16.msra.mxu0 0
        %575 = vmatprep.subr.bf16.mxu0 0
        %576 = vmatpush1.bf16.msra.mxu0 0
        %577 = vmatprep.subr.bf16.mxu0 0
        %578 = vmatpush1.bf16.msra.mxu0 0
        %579 = vmatprep.subr.bf16.mxu0 0
        %580 = vmatpush1.bf16.msra.mxu0 0
        %581 = vmatprep.subr.bf16.mxu0 0
        %582 = vmatpush1.bf16.msra.mxu0 0
        %583 = vmatprep.subr.bf16.mxu0 0
        %584 = vmatpush1.bf16.msra.mxu0 0
        %585 = vmatprep.subr.bf16.mxu0 0
        %586 = vmatpush1.bf16.msra.mxu0 0
        %587 = vmatprep.subr.bf16.mxu0 0
        %588 = vmatpush1.bf16.msra.mxu0 0
        %589 = vmatprep.mubr.bf16.mxu0 0
        %590 = vmatmul.mubr.bf16.gmra.mrb[0].mxu0 %v555
        %v591 = vpop.f32.mrb[0].mxu0
        %v592 = vadd.f32 0.0, %v591
        %v593 = vpop.f32.mrb[0].mxu0
        %v594 = vpop.f32.mrb[0].mxu0
        %v595 = vpop.f32.mrb[0].mxu0
        %596 = vdwg.mxu0
        %v597 = vld [vmem:[#allocation4] sm:$0xf]
        %v599 = vsel %vm553, %v597, 0
        %601 = vmatprep.subr.bf16.mxu0 0
        %602 = vmatpush1.bf16.msra.mxu0 %v550
        %603 = vmatprep.subr.bf16.mxu0 0
        %604 = vmatpush1.bf16.msra.mxu0 0
        %605 = vmatprep.subr.bf16.mxu0 0
        %606 = vmatpush1.bf16.msra.mxu0 0
        %607 = vmatprep.subr.bf16.mxu0 0
        %608 = vmatpush1.bf16.msra.mxu0 0
        %609 = vmatprep.subr.bf16.mxu0 0
        %610 = vmatpush1.bf16.msra.mxu0 0
        %611 = vmatprep.subr.bf16.mxu0 0
        %612 = vmatpush1.bf16.msra.mxu0 0
        %613 = vmatprep.subr.bf16.mxu0 0
        %614 = vmatpush1.bf16.msra.mxu0 0
        %615 = vmatprep.subr.bf16.mxu0 0
        %616 = vmatpush1.bf16.msra.mxu0 0
        %617 = vmatprep.subr.bf16.mxu0 0
        %618 = vmatpush1.bf16.msra.mxu0 0
        %619 = vmatprep.subr.bf16.mxu0 0
        %620 = vmatpush1.bf16.msra.mxu0 0
        %621 = vmatprep.subr.bf16.mxu0 0
        %622 = vmatpush1.bf16.msra.mxu0 0
        %623 = vmatprep.subr.bf16.mxu0 0
        %624 = vmatpush1.bf16.msra.mxu0 0
        %625 = vmatprep.subr.bf16.mxu0 0
        %626 = vmatpush1.bf16.msra.mxu0 0
        %627 = vmatprep.subr.bf16.mxu0 0
        %628 = vmatpush1.bf16.msra.mxu0 0
        %629 = vmatprep.subr.bf16.mxu0 0
        %630 = vmatpush1.bf16.msra.mxu0 0
        %631 = vmatprep.subr.bf16.mxu0 0
        %632 = vmatpush1.bf16.msra.mxu0 0
        %633 = vmatprep.mubr.bf16.mxu0 0
        %634 = vmatmul.mubr.bf16.gmra.mrb[0].mxu0 %v599
        %v635 = vpop.f32.mrb[0].mxu0
        %v636 = vadd.f32 0.0, %v635
        %v637 = vpop.f32.mrb[0].mxu0
        %v638 = vpop.f32.mrb[0].mxu0
        %v639 = vpop.f32.mrb[0].mxu0
        %640 = vdwg.mxu0
        %v641 = vld [vmem:[#allocation6] sm:$0xf]
        %v642 = vld [vmem:[#allocation6 + $0x4] sm:$0x3]
        %v645 = vunpack.c.l.b16 %v641
        %v646 = vunpack.c.l.b16 %v642
        %v647 = vpack.c.b16 %v646, %v645
        %v649 = vsel %vm553, %v647, 0
        %651 = vmatprep.subr.bf16.mxu0 0
        %652 = vmatpush1.bf16.msra.mxu0 %v551
        %653 = vmatprep.subr.bf16.mxu0 0
        %654 = vmatpush1.bf16.msra.mxu0 0
        %655 = vmatprep.subr.bf16.mxu0 0
        %656 = vmatpush1.bf16.msra.mxu0 0
        %657 = vmatprep.subr.bf16.mxu0 0
        %658 = vmatpush1.bf16.msra.mxu0 0
        %659 = vmatprep.subr.bf16.mxu0 0
        %660 = vmatpush1.bf16.msra.mxu0 0
        %661 = vmatprep.subr.bf16.mxu0 0
        %662 = vmatpush1.bf16.msra.mxu0 0
        %663 = vmatprep.subr.bf16.mxu0 0
        %664 = vmatpush1.bf16.msra.mxu0 0
        %665 = vmatprep.subr.bf16.mxu0 0
        %666 = vmatpush1.bf16.msra.mxu0 0
        %667 = vmatprep.subr.bf16.mxu0 0
        %668 = vmatpush1.bf16.msra.mxu0 0
        %669 = vmatprep.subr.bf16.mxu0 0
        %670 = vmatpush1.bf16.msra.mxu0 0
        %671 = vmatprep.subr.bf16.mxu0 0
        %672 = vmatpush1.bf16.msra.mxu0 0
        %673 = vmatprep.subr.bf16.mxu0 0
        %674 = vmatpush1.bf16.msra.mxu0 0
        %675 = vmatprep.subr.bf16.mxu0 0
        %676 = vmatpush1.bf16.msra.mxu0 0
        %677 = vmatprep.subr.bf16.mxu0 0
        %678 = vmatpush1.bf16.msra.mxu0 0
        %679 = vmatprep.subr.bf16.mxu0 0
        %680 = vmatpush1.bf16.msra.mxu0 0
        %681 = vmatprep.subr.bf16.mxu0 0
        %682 = vmatpush1.bf16.msra.mxu0 0
        %683 = vmatprep.mubr.bf16.mxu0 0
        %684 = vmatmul.mubr.bf16.gmra.mrb[0].mxu0 %v649
        %v685 = vpop.f32.mrb[0].mxu0
        %v686 = vadd.f32 0.0, %v685
        %v687 = vpop.f32.mrb[0].mxu0
        %v688 = vpop.f32.mrb[0].mxu0
        %v689 = vadd.f32 0.0, %v688
        %v690 = vpop.f32.mrb[0].mxu0
        %691 = vdwg.mxu0
        %v692 = vld [vmem:[%s4] sm:$0xff]
        %v693 = vld [vmem:[%s4 + $0x8] sm:$0xff]
        %v694 = vld [vmem:[%s4 + $0x10] sm:$0xff]
        %v695 = vld [vmem:[%s4 + $0x18] sm:$0xf]
        %697 = vset.pattern.permute.xlu0 0
        %698 = vperm.xlu0 %697, %v692
        %v699 = vpop.permute.xlu0 %698
        %702 = vset.pattern.permute.xlu0 0
        %703 = vperm.xlu0 %702, %v693
        %v704 = vpop.permute.xlu0 %703
        %707 = vset.pattern.permute.xlu0 0
        %708 = vperm.xlu0 %707, %v694
        %v709 = vpop.permute.xlu0 %708
        %712 = vset.pattern.permute.xlu0 0
        %713 = vperm.xlu0 %712, %v695
        %v714 = vpop.permute.xlu0 %713
        %v716 = vadd.f32 %v592, %v699
        %v717 = vadd.f32 %v636, %v704
        %v718 = vadd.f32 %v686, %v709
        %v719 = vadd.f32 %v689, %v714
        %720 = vst [vmem:[%s356] sm:$0xff] %v716
        %721 = vst [vmem:[%s356 + $0x8] sm:$0xff] %v717
        %722 = vst [vmem:[%s356 + $0x10] sm:$0xff] %v718
        %723 = vst [vmem:[%s356 + $0x18] sm:$0xf] %v719
        %s724 = sand.u32 %s218, 1
        %s725 = sand.u32 %s218, 1
        %s726 = smul.addr %s725, 32
        %s727 = scalar_lea.vmem [#allocation7], %s726
        // Predicated region
        $region65: #{decoder_forward.1} parent=51 // pred_check
          %p728 = pneg %p228
        $region66: #{decoder_forward.1} parent=51 // pred_check_branch
          %730 = sbr.rel (%p728) target = $region68
        $region67: #{decoder_forward.1} parent=51 // pred_region
          %s731 = smul.addr %s25, 16
          %s732 = sadd.s32 %s26, %s731
          %s733 = smul.addr %s732, 8
          %s734 = scalar_lea.vmem %s8, %s733
          // Predicated region
          $region69: #{decoder_forward.1} parent=67 // pred_check
            _
          $region70: #{decoder_forward.1} parent=67 // pred_check_branch
            %736 = sbr.rel (0) target = $region72
          $region71: #{decoder_forward.1} parent=67 // pred_region
            // Predicated region
            $region73: #{decoder_forward.1} parent=71 // pred_check
              _
            $region74: #{decoder_forward.1} parent=71 // pred_check_branch
              %738 = sbr.rel (0) target = $region76
            $region75: #{decoder_forward.1} parent=71 // pred_region
              // Predicated region
              $region88: #{decoder_forward.1} parent=75 // pred_check
                _
              $region89: #{decoder_forward.1} parent=75 // pred_check_branch
                %759 = sbr.rel (0) target = $region91
              $region90: #{decoder_forward.1} parent=75 // pred_region
                loop: start=0, step=1, limit=1
                $region92: #{decoder_forward.1} parent=90 // loop_pre_header
                  _
                $region93: #{decoder_forward.1} parent=90 // loop_header
                  %s761 = sphi 0, %s765
                  %p762 = scmp.ge.s32.totalorder %s761, 1
                  %s766 = sphi %s727, %s727
                  %s767 = sphi %s734, %s734
                $region94: #{decoder_forward.1} parent=90 // loop_header_branch
                  %764 = sbr.rel (%p762) target = $region98
                $region95: #{decoder_forward.1} parent=90 // loop_body
                  %v768 = vld [vmem:[%s766] sm:$0xff]
                  %769 = vst [vmem:[%s767] sm:$0xff] %v768
                  %v770 = vld [vmem:[%s766 + $0x8] sm:$0xff]
                  %771 = vst [vmem:[%s767 + $0x20] sm:$0xff] %v770
                  %v772 = vld [vmem:[%s766 + $0x10] sm:$0xff]
                  %773 = vst [vmem:[%s767 + $0x40] sm:$0xff] %v772
                  %v774 = vld [vmem:[%s766 + $0x18] sm:$0xff]
                  %775 = vst [vmem:[%s767 + $0x60] sm:$0xff] %v774
                $region96: #{decoder_forward.1} parent=90 // loop_footer
                  %s765 = sadd.s32 1, %s761
                $region97: #{decoder_forward.1} parent=90 // loop_footer_branch
                  %760 = sbr.rel target = $region93
                $region98: #{decoder_forward.1} parent=90 // loop_exit
                  _
              $region91: #{decoder_forward.1} parent=75 // pred_fallthru
                _
              // Predicated region
              $region99: #{decoder_forward.1} parent=75 // pred_check
                _
              $region100: #{decoder_forward.1} parent=75 // pred_check_branch
                %777 = sbr.rel target = $region102
              $region101: #{decoder_forward.1} parent=75 // pred_region
                _
              $region102: #{decoder_forward.1} parent=75 // pred_fallthru
                _
            $region76: #{decoder_forward.1} parent=71 // pred_fallthru
              _
            // Predicated region
            $region77: #{decoder_forward.1} parent=71 // pred_check
              _
            $region78: #{decoder_forward.1} parent=71 // pred_check_branch
              %740 = sbr.rel target = $region80
            $region79: #{decoder_forward.1} parent=71 // pred_region
              loop: start=0, step=1, limit=1
              $region81: #{decoder_forward.1} parent=79 // loop_pre_header
                _
              $region82: #{decoder_forward.1} parent=79 // loop_header
                %s743 = sphi 0, %s747
                %p744 = scmp.ge.s32.totalorder %s743, 1
                %s748 = sphi %s727, %s727
                %s749 = sphi %s734, %s734
              $region83: #{decoder_forward.1} parent=79 // loop_header_branch
                %746 = sbr.rel (%p744) target = $region87
              $region84: #{decoder_forward.1} parent=79 // loop_body
                %v750 = vld [vmem:[%s748] sm:$0xff]
                %751 = vst [vmem:[%s749] sm:$0xff] %v750
                %v752 = vld [vmem:[%s748 + $0x8] sm:$0xff]
                %753 = vst [vmem:[%s749 + $0x20] sm:$0xff] %v752
                %v754 = vld [vmem:[%s748 + $0x10] sm:$0xff]
                %755 = vst [vmem:[%s749 + $0x40] sm:$0xff] %v754
                %v756 = vld [vmem:[%s748 + $0x18] sm:$0xff]
                %757 = vst [vmem:[%s749 + $0x60] sm:$0xff] %v756
              $region85: #{decoder_forward.1} parent=79 // loop_footer
                %s747 = sadd.s32 1, %s743
              $region86: #{decoder_forward.1} parent=79 // loop_footer_branch
                %742 = sbr.rel target = $region82
              $region87: #{decoder_forward.1} parent=79 // loop_exit
                _
            $region80: #{decoder_forward.1} parent=71 // pred_fallthru
              _
          $region72: #{decoder_forward.1} parent=67 // pred_fallthru
            _
          %778 = vnop
        $region68: #{decoder_forward.1} parent=51 // pred_fallthru
          _
      $region52: #{decoder_forward.1} parent=5 // pred_fallthru
        _
      %p779 = scmp.le.s32.totalorder 2, %s16
      // Predicated region
      $region103: #{decoder_forward.1} parent=5 // pred_check
        %p780 = pneg %p779
      $region104: #{decoder_forward.1} parent=5 // pred_check_branch
        %782 = sbr.rel (%p780) target = $region106
      $region105: #{decoder_forward.1} parent=5 // pred_region
        %s783 = ssub.s32 %s16, 2
        // Predicated region
        $region107: #{decoder_forward.1} parent=105 // pred_check
          %p784 = pneg %p234
        $region108: #{decoder_forward.1} parent=105 // pred_check_branch
          %786 = sbr.rel (%p784) target = $region110
        $region109: #{decoder_forward.1} parent=105 // pred_region
          %s787 = sand.u32 %s219, 1
          %s788 = sand.u32 %s219, 1
          %s789 = smul.addr %s788, 32
          %s790 = scalar_lea.vmem [#allocation7], %s789
        $region110: #{decoder_forward.1} parent=105 // pred_fallthru
          _
      $region106: #{decoder_forward.1} parent=5 // pred_fallthru
        _
    $region6: #{decoder_forward.1} parent=1 // loop_footer
      %s20 = sadd.s32 1, %s16
    $region7: #{decoder_forward.1} parent=1 // loop_footer_branch
      %15 = sbr.rel target = $region3
    $region8: #{decoder_forward.1} parent=1 // loop_exit
      _
    %791 = vsyncpa [#allocation3], 1
    %s792 = scalar_lea.sflag [#allocation3], 1
    %793 = vsyncpa %s792, 1
    %794 = vsyncpa [#allocation5], 1

</llo_original>
